<compile_context>
chip_gen: v7x
topology: tpu7x:2x2x1
jax: 0.10.0
libtpu: 0.0.40
codegen_flags: <defaults>
</compile_context>

<pallas_src>
import functools

import jax
import jax.numpy as jnp
from jax.experimental import pallas as pl
from jax.experimental.pallas import tpu as pltpu


# ---------------------------------------------------------------------------
# Kernels
# ---------------------------------------------------------------------------
def _cond_kernel(x_ref, w2_ref, sc_ref, wc_ref, bc_ref, o_ref, *, compute_dtype):
    # transition2: x @ W2 (cast to compute dtype on the VPU, f32 MXU accumulate)
    out = jnp.dot(x_ref[...].astype(compute_dtype), w2_ref[...],
                  preferred_element_type=jnp.float32)
    # adaptive_zero_cond: single_cond @ Wc + bc; gate math stays f32
    cond = jnp.dot(sc_ref[...].astype(compute_dtype), wc_ref[...],
                   preferred_element_type=jnp.float32) + bc_ref[...]
    o_ref[...] = (jax.nn.sigmoid(cond) * out).astype(o_ref.dtype)


def _nocond_kernel(x_ref, w2_ref, o_ref, *, compute_dtype):
    o_ref[...] = jnp.dot(x_ref[...].astype(compute_dtype), w2_ref[...],
                         preferred_element_type=jnp.float32).astype(o_ref.dtype)


def _cond_kernel_ksplit(x_ref, w2_ref, sc_ref, wc_ref, bc_ref, o_ref, acc_ref,
                        *, compute_dtype):
    k = pl.program_id(1)

    @pl.when(k == 0)
    def _():
        acc_ref[...] = jnp.zeros_like(acc_ref)

    acc_ref[...] += jnp.dot(x_ref[...].astype(compute_dtype), w2_ref[...],
                            preferred_element_type=jnp.float32)

    @pl.when(k == pl.num_programs(1) - 1)
    def _():
        cond = jnp.dot(sc_ref[...].astype(compute_dtype), wc_ref[...],
                       preferred_element_type=jnp.float32) + bc_ref[...]
        o_ref[...] = (jax.nn.sigmoid(cond) * acc_ref[...]).astype(o_ref.dtype)


def _nocond_kernel_ksplit(x_ref, w2_ref, o_ref, acc_ref, *, compute_dtype):
    k = pl.program_id(1)

    @pl.when(k == 0)
    def _():
        acc_ref[...] = jnp.zeros_like(acc_ref)

    acc_ref[...] += jnp.dot(x_ref[...].astype(compute_dtype), w2_ref[...],
                            preferred_element_type=jnp.float32)

    @pl.when(k == pl.num_programs(1) - 1)
    def _():
        o_ref[...] = acc_ref[...].astype(o_ref.dtype)


# ---------------------------------------------------------------------------
# Helpers
# ---------------------------------------------------------------------------
def _round_up(x, m):
    return ((x + m - 1) // m) * m


def _vmem_capacity_bytes():
    """Per-core VMEM capacity (128 MiB v5e/v6e, 64 MiB v7x); safe fallback."""
    try:
        cap = getattr(pltpu.get_tpu_info(), "vmem_capacity_bytes", None)
        if cap:
            return int(cap)
    except Exception:
        pass
    return 64 * 1024 * 1024  # conservative: v7x per-TensorCore VMEM


def _footprint_bytes(tm, tk, nkb, scd, nc_out, x_bytes, sc_bytes, cmp_bytes,
                     out_bytes, cond, nbuf_in):
    """Estimated VMEM footprint of one pipelined grid step."""
    f = nbuf_in * tm * tk * x_bytes                        # x tiles (multi-buffered)
    if cond:
        f += nbuf_in * tm * scd * sc_bytes                 # single_cond tiles
    f += (1 if nkb == 1 else 2) * tk * nc_out * cmp_bytes  # W2 resident / streamed
    if cond:
        f += scd * nc_out * cmp_bytes + nc_out * 4         # Wc resident + bias
    f += 2 * tm * nc_out * out_bytes                       # output tiles
    f += tm * (tk + (scd if cond else 0)) * cmp_bytes      # in-kernel bf16 casts
    f += 3 * tm * nc_out * 4                               # f32 dot results / gate
    if nkb > 1:
        f += tm * nc_out * 4                               # f32 accumulator scratch
    return f


def _k_split_candidates(ni):
    out = []
    for nkb in range(2, 65):
        if ni % nkb == 0 and (ni // nkb) % 128 == 0:
            out.append(nkb)
    return out


def _choose_tiling(rows, ni, scd, nc_out, x_bytes, sc_bytes, cmp_bytes,
                   out_bytes, cond, budget_bytes, max_block_rows, nbuf_in,
                   num_k_blocks):
    """Pick (row tile, num K blocks) whose footprint fits the VMEM budget."""
    tm_cap = max(8, min(max_block_rows, _round_up(rows, 8)))
    cands, seen = [], set()
    for t in (512, 256, 128, 64, 32, 16, 8):
        t = min(t, tm_cap)
        if t not in seen:
            seen.add(t)
            cands.append(t)

    def fits(tm, tk, nkb):
        return _footprint_bytes(tm, tk, nkb, scd, nc_out, x_bytes, sc_bytes,
                                cmp_bytes, out_bytes, cond,
                                nbuf_in) <= budget_bytes

    if num_k_blocks is not None:
        assert ni % num_k_blocks == 0, "num_k_blocks must divide num_intermediates"
        tk = ni // num_k_blocks
        assert num_k_blocks == 1 or tk % 128 == 0, "K tile must be a multiple of 128"
        for tm in cands:
            if fits(tm, tk, num_k_blocks):
                return tm, num_k_blocks
        return cands[-1], num_k_blocks

    # 1) Largest row tile with the full K resident in VMEM (prefer tm >= 128).
    for tm in cands:
        if tm < 128 and cands[0] >= 128:
            break  # try a K split before starving the MXU with tiny row tiles
        if fits(tm, ni, 1):
            return tm, 1
    # 2) K-split fallback (keeps tm >= 128, accumulates in f32 VMEM scratch).
    for tm in ([t for t in cands if t >= 128] or cands[:1]):
        for nkb in _k_split_candidates(ni):
            if fits(tm, ni // nkb, nkb):
                return tm, nkb
    # 3) Last resort: shrink tm with the full K.
    for tm in cands:
        if fits(tm, ni, 1):
            return tm, 1
    return cands[-1], 1


# ---------------------------------------------------------------------------
# Wrapper
# ---------------------------------------------------------------------------
def adaptive_zero_init(x, w2, single_cond=None, wc=None, bc=None, *,
                       compute_dtype=jnp.bfloat16, out_dtype=None,
                       max_block_rows=512, input_buffers=None,
                       num_k_blocks=None):
    """Pallas implementation of AdaptiveZeroInit.forward.

    Args:
      x:             [..., num_intermediates]
      w2:            [num_intermediates, num_channels]       (== PyTorch weight.T)
      single_cond:   optional [..., single_channels]
      wc:            optional [single_channels, num_channels] (== PyTorch weight.T)
      bc:            optional [num_channels]
      compute_dtype: MXU operand dtype (bf16 default; f32 for exact parity)
      out_dtype:     output dtype (default x.dtype; bf16 halves writeback traffic)
      input_buffers: pipeline depth for the row-tiled activations (None = default 2;
                     3 can hide DMA jitter on v6e/v7x, wasteful on v5e)
      num_k_blocks:  force a K split (must divide num_intermediates; tile % 128 == 0)
    Returns:
      [..., num_channels]
    """
    orig_shape = x.shape
    ni, nc = w2.shape
    assert orig_shape[-1] == ni, "x last dim must equal num_intermediates"

    out_dtype = x.dtype if out_dtype is None else jnp.dtype(out_dtype)
    cond = single_cond is not None
    scd = wc.shape[0] if cond else 0

    rows = 1
    for d in orig_shape[:-1]:
        rows *= d

    # Lane-dense output: pad channel dim only if not already 128-aligned
    # (no-op for AF3's num_channels=768; avoids the output slice otherwise).
    nc_out = nc if nc % 128 == 0 else _round_up(nc, 128)

    x_bytes = jnp.dtype(x.dtype).itemsize
    sc_bytes = jnp.dtype(single_cond.dtype).itemsize if cond else 0
    cmp_bytes = jnp.dtype(compute_dtype).itemsize
    out_bytes = jnp.dtype(out_dtype).itemsize

    vmem_cap = _vmem_capacity_bytes()
    budget_bytes = (vmem_cap * 3) // 4          # ~96 MiB v5e/v6e, ~48 MiB v7x
    vmem_limit = min(vmem_cap, (vmem_cap * 17) // 20)
    nbuf_in = input_buffers if input_buffers is not None else 2

    tm, nkb = _choose_tiling(rows, ni, scd, nc_out, x_bytes, sc_bytes,
                             cmp_bytes, out_bytes, cond, budget_bytes,
                             max_block_rows, nbuf_in, num_k_blocks)
    tk = ni // nkb
    n_row_blocks = pl.cdiv(rows, tm)

    # Activations: native dtype, no wrapper cast / pad; ragged last row block
    # is handled by Pallas masking of out-of-bounds writes.
    x2d = x.reshape(rows, ni)

    # Weights: cast (and lane-pad if needed) once in the wrapper — tiny, constant.
    w2p = w2.astype(compute_dtype)
    if nc_out != nc:
        w2p = jnp.pad(w2p, ((0, 0), (0, nc_out - nc)))

    flops = 2 * rows * nc * (ni + scd)
    bytes_accessed = (rows * ni * x_bytes + rows * scd * sc_bytes
                      + (ni + scd) * nc_out * cmp_bytes
                      + (nc_out * 4 if cond else 0)
                      + rows * nc_out * out_bytes)
    cost = pl.CostEstimate(flops=flops,
                           transcendentals=rows * nc if cond else 0,
                           bytes_accessed=bytes_accessed)

    in_mode = None if input_buffers is None else pl.Buffered(input_buffers)
    resident = pl.Buffered(1)  # weights / bias never change across the grid

    if nkb == 1:
        dims = ("parallel",)
        grid = (n_row_blocks,)
        x_spec = pl.BlockSpec((tm, ni), lambda i: (i, 0), pipeline_mode=in_mode)
        w2_spec = pl.BlockSpec((ni, nc_out), lambda i: (0, 0), pipeline_mode=resident)
        out_spec = pl.BlockSpec((tm, nc_out), lambda i: (i, 0))
        scratch = []
        if cond:
            sc_spec = pl.BlockSpec((tm, scd), lambda i: (i, 0), pipeline_mode=in_mode)
            wc_spec = pl.BlockSpec((scd, nc_out), lambda i: (0, 0), pipeline_mode=resident)
            bc_spec = pl.BlockSpec((1, nc_out), lambda i: (0, 0), pipeline_mode=resident)
            kernel = functools.partial(_cond_kernel, compute_dtype=compute_dtype)
        else:
            kernel = functools.partial(_nocond_kernel, compute_dtype=compute_dtype)
    else:
        dims = ("parallel", "arbitrary")
        grid = (n_row_blocks, nkb)
        x_spec = pl.BlockSpec((tm, tk), lambda i, k: (i, k), pipeline_mode=in_mode)
        w2_spec = pl.BlockSpec((tk, nc_out), lambda i, k: (k, 0))  # streams over K
        out_spec = pl.BlockSpec((tm, nc_out), lambda i, k: (i, 0))
        scratch = [pltpu.VMEM((tm, nc_out), jnp.float32)]
        if cond:
            sc_spec = pl.BlockSpec((tm, scd), lambda i, k: (i, 0), pipeline_mode=in_mode)
            wc_spec = pl.BlockSpec((scd, nc_out), lambda i, k: (0, 0), pipeline_mode=resident)
            bc_spec = pl.BlockSpec((1, nc_out), lambda i, k: (0, 0), pipeline_mode=resident)
            kernel = functools.partial(_cond_kernel_ksplit, compute_dtype=compute_dtype)
        else:
            kernel = functools.partial(_nocond_kernel_ksplit, compute_dtype=compute_dtype)

    compiler_params = pltpu.CompilerParams(
        dimension_semantics=dims,       # both TensorCores on v7x; no-op on v5e/v6e
        vmem_limit_bytes=vmem_limit,
    )

    if cond:
        assert single_cond.shape[:-1] == orig_shape[:-1]
        assert single_cond.shape[-1] == scd
        sc2d = single_cond.reshape(rows, scd)
        wcp = wc.astype(compute_dtype)
        bc2d = bc.reshape(1, nc).astype(jnp.float32)  # gate math stays f32
        if nc_out != nc:
            wcp = jnp.pad(wcp, ((0, 0), (0, nc_out - nc)))
            bc2d = jnp.pad(bc2d, ((0, 0), (0, nc_out - nc)))
        in_specs = [x_spec, w2_spec, sc_spec, wc_spec, bc_spec]
        operands = (x2d, w2p, sc2d, wcp, bc2d)
    else:
        in_specs = [x_spec, w2_spec]
        operands = (x2d, w2p)

    out2d = pl.pallas_call(
        kernel,
        out_shape=jax.ShapeDtypeStruct((rows, nc_out), out_dtype),
        grid_spec=pltpu.PrefetchScalarGridSpec(
            num_scalar_prefetch=0,
            grid=grid,
            in_specs=in_specs,
            out_specs=out_spec,
            scratch_shapes=scratch,
        ),
        compiler_params=compiler_params,
        cost_estimate=cost,
    )(*operands)

    if nc_out != nc:
        out2d = out2d[:, :nc]
    return out2d.reshape(orig_shape[:-1] + (nc,))


# ---------------------------------------------------------------------------
# Pure-JAX reference (mirrors the PyTorch forward, f32)
# ---------------------------------------------------------------------------
def adaptive_zero_init_ref(x, w2, single_cond=None, wc=None, bc=None):
    out = jnp.einsum("...i,ij->...j", x, w2)
    if single_cond is not None:
        cond = jnp.einsum("...s,sj->...j", single_cond, wc) + bc
        out = jax.nn.sigmoid(cond) * out
    return out


if __name__ == "__main__":
    # ---- Test 1 & 2: small module-consistent shapes (single-K fast path) ----
    batch, seq = 2, 8
    num_intermediates = 32   # transition2 input dim
    num_channels = 16        # transition2 output dim
    single_channels = 24     # adaptive_zero_cond input dim

    key = jax.random.PRNGKey(0)
    k_x, k_sc, k_w2, k_wc, k_bc, k_x2, k_sc2, k_w22, k_wc2, k_bc2 = jax.random.split(key, 10)

    x = jax.random.normal(k_x, (batch, seq, num_intermediates), dtype=jnp.float32)
    single_cond = jax.random.normal(k_sc, (batch, seq, single_channels), dtype=jnp.float32)
    w2 = jax.random.normal(k_w2, (num_intermediates, num_channels), dtype=jnp.float32) * 0.1
    wc = jax.random.normal(k_wc, (single_channels, num_channels), dtype=jnp.float32) * 0.1
    bc = jax.random.normal(k_bc, (num_channels,), dtype=jnp.float32) * 0.1

    # Conditioned path (use_single_cond=True branch of the module).
    out = jax.block_until_ready(adaptive_zero_init(x, w2, single_cond, wc, bc))
    ref = adaptive_zero_init_ref(x, w2, single_cond, wc, bc)
    assert out.shape == (batch, seq, num_channels)
    assert jnp.allclose(out, ref, atol=5e-2, rtol=2e-2), "cond path mismatch"

    # Unconditioned path (single_cond is None).
    out_nc = jax.block_until_ready(adaptive_zero_init(x, w2))
    ref_nc = adaptive_zero_init_ref(x, w2)
    assert jnp.allclose(out_nc, ref_nc, atol=5e-2, rtol=2e-2), "no-cond path mismatch"

    # ---- Test 3 & 4: exercise the K-split accumulator path (forced) --------
    ni2, nc2, sc2d = 256, 128, 64
    x_b = jax.random.normal(k_x2, (batch, seq, ni2), dtype=jnp.float32)
    scnd_b = jax.random.normal(k_sc2, (batch, seq, sc2d), dtype=jnp.float32)
    w2_b = jax.random.normal(k_w22, (ni2, nc2), dtype=jnp.float32) * 0.1
    wc_b = jax.random.normal(k_wc2, (sc2d, nc2), dtype=jnp.float32) * 0.1
    bc_b = jax.random.normal(k_bc2, (nc2,), dtype=jnp.float32) * 0.1

    out_k = jax.block_until_ready(
        adaptive_zero_init(x_b, w2_b, scnd_b, wc_b, bc_b, num_k_blocks=2))
    ref_k = adaptive_zero_init_ref(x_b, w2_b, scnd_b, wc_b, bc_b)
    assert jnp.allclose(out_k, ref_k, atol=5e-2, rtol=2e-2), "cond K-split mismatch"

    out_knc = jax.block_until_ready(adaptive_zero_init(x_b, w2_b, num_k_blocks=2))
    ref_knc = adaptive_zero_init_ref(x_b, w2_b)
    assert jnp.allclose(out_knc, ref_knc, atol=5e-2, rtol=2e-2), "no-cond K-split mismatch"

    print("KERNEL_OK")
</pallas_src>

<mosaic_0001>
module attributes {stable_mosaic.version = 11 : i64} {
  func.func @_cond_kernel(%arg0: i32, %arg1: memref<16x32xf32, #tpu.memory_space<vmem>>, %arg2: memref<32x128xbf16, #tpu.memory_space<vmem>>, %arg3: memref<16x24xf32, #tpu.memory_space<vmem>>, %arg4: memref<24x128xbf16, #tpu.memory_space<vmem>>, %arg5: memref<1x128xf32, #tpu.memory_space<vmem>>, %arg6: memref<16x128xf32, #tpu.memory_space<vmem>>) attributes {dimension_semantics = [#tpu.dimension_semantics<parallel>], iteration_bounds = array<i64: 1>, scalar_prefetch = 0 : i64, scratch_operands = 0 : i64, tpu.core_type = #tpu.core_type<tc>, window_params = [{transform_indices = @transform_0, window_bounds = array<i64: 16, 32>}, {pipeline_mode = #tpu.pipeline_mode<synchronous>, transform_indices = @transform_1, window_bounds = array<i64: 32, 128>}, {transform_indices = @transform_2, window_bounds = array<i64: 16, 24>}, {pipeline_mode = #tpu.pipeline_mode<synchronous>, transform_indices = @transform_3, window_bounds = array<i64: 24, 128>}, {pipeline_mode = #tpu.pipeline_mode<synchronous>, transform_indices = @transform_4, window_bounds = array<i64: 1, 128>}, {transform_indices = @transform_5, window_bounds = array<i64: 16, 128>}]} {
    %c0 = arith.constant 0 : index
    %c0_0 = arith.constant 0 : index
    %0 = vector.load %arg1[%c0, %c0_0] : memref<16x32xf32, #tpu.memory_space<vmem>>, vector<16x32xf32>
    %1 = arith.truncf %0 : vector<16x32xf32> to vector<16x32xbf16>
    %c0_1 = arith.constant 0 : index
    %c0_2 = arith.constant 0 : index
    %2 = vector.load %arg2[%c0_1, %c0_2] : memref<32x128xbf16, #tpu.memory_space<vmem>>, vector<32x128xbf16>
    %cst = arith.constant dense<0.000000e+00> : vector<16x128xf32>
    %3 = tpu.matmul %1, %2, %cst {dimension_numbers = #tpu.dot_dimension_numbers<[1], [0], [0], [1], [0, 0, 1, 1], [], []>} : vector<16x32xbf16>, vector<32x128xbf16>, vector<16x128xf32> -> vector<16x128xf32>
    %c0_3 = arith.constant 0 : index
    %c0_4 = arith.constant 0 : index
    %4 = vector.load %arg3[%c0_3, %c0_4] : memref<16x24xf32, #tpu.memory_space<vmem>>, vector<16x24xf32>
    %5 = arith.truncf %4 : vector<16x24xf32> to vector<16x24xbf16>
    %c0_5 = arith.constant 0 : index
    %c0_6 = arith.constant 0 : index
    %6 = vector.load %arg4[%c0_5, %c0_6] : memref<24x128xbf16, #tpu.memory_space<vmem>>, vector<24x128xbf16>
    %cst_7 = arith.constant dense<0.000000e+00> : vector<16x128xf32>
    %7 = tpu.matmul %5, %6, %cst_7 {dimension_numbers = #tpu.dot_dimension_numbers<[1], [0], [0], [1], [0, 0, 1, 1], [], []>} : vector<16x24xbf16>, vector<24x128xbf16>, vector<16x128xf32> -> vector<16x128xf32>
    %c0_8 = arith.constant 0 : index
    %c0_9 = arith.constant 0 : index
    %8 = vector.load %arg5[%c0_8, %c0_9] : memref<1x128xf32, #tpu.memory_space<vmem>>, vector<1x128xf32>
    %9 = vector.broadcast %8 : vector<1x128xf32> to vector<16x128xf32>
    %10 = arith.addf %7, %9 : vector<16x128xf32>
    %11 = arith.negf %10 : vector<16x128xf32>
    %12 = math.exp %11 : vector<16x128xf32>
    %cst_10 = arith.constant 1.000000e+00 : f32
    %13 = vector.broadcast %cst_10 : f32 to vector<16x128xf32>
    %14 = arith.addf %13, %12 : vector<16x128xf32>
    %15 = arith.divf %13, %14 : vector<16x128xf32>
    %16 = arith.mulf %15, %3 : vector<16x128xf32>
    %c0_11 = arith.constant 0 : index
    %c0_12 = arith.constant 0 : index
    %17 = vector.load %arg6[%c0_11, %c0_12] : memref<16x128xf32, #tpu.memory_space<vmem>>, vector<16x128xf32>
    tpu.vector_store %arg6[%c0_11, %c0_12], %16 {strides = array<i32>} : memref<16x128xf32, #tpu.memory_space<vmem>>, vector<16x128xf32>,
    return
  }
  func.func @transform_0(%arg0: i32) -> (i32, i32) {
    %c0_i32 = arith.constant 0 : i32
    %c0_i32_0 = arith.constant 0 : i32
    return %arg0, %c0_i32 : i32, i32
  }
  func.func @transform_1(%arg0: i32) -> (i32, i32) {
    %c0_i32 = arith.constant 0 : i32
    %c0_i32_0 = arith.constant 0 : i32
    %c0_i32_1 = arith.constant 0 : i32
    return %c0_i32, %c0_i32_0 : i32, i32
  }
  func.func @transform_2(%arg0: i32) -> (i32, i32) {
    %c0_i32 = arith.constant 0 : i32
    %c0_i32_0 = arith.constant 0 : i32
    return %arg0, %c0_i32 : i32, i32
  }
  func.func @transform_3(%arg0: i32) -> (i32, i32) {
    %c0_i32 = arith.constant 0 : i32
    %c0_i32_0 = arith.constant 0 : i32
    %c0_i32_1 = arith.constant 0 : i32
    return %c0_i32, %c0_i32_0 : i32, i32
  }
  func.func @transform_4(%arg0: i32) -> (i32, i32) {
    %c0_i32 = arith.constant 0 : i32
    %c0_i32_0 = arith.constant 0 : i32
    %c0_i32_1 = arith.constant 0 : i32
    return %c0_i32, %c0_i32_0 : i32, i32
  }
  func.func @transform_5(%arg0: i32) -> (i32, i32) {
    %c0_i32 = arith.constant 0 : i32
    %c0_i32_0 = arith.constant 0 : i32
    return %arg0, %c0_i32 : i32, i32
  }
}

</mosaic_0001>

<llo_original>
// kernel: tpu_custom_call.1
$region0: #{tpu_custom_call.1}
  #allocation0 [shape = 'u32[]', space=smem, size = 0x4, offset = 0x4, fixed_abs, tag = 'smem constant byte address 0x4 - core index']
  #allocation1 [shape = 'u32[144,128]{1,0:T(1,128)}', space=vmem, size = 0x12000, scoped, tag = 'internal scratch']
  %s0 = inlined_call_operand.hbm [shape: f32[16,32], index: 0, kind: input, shape index: {}]
  %s1 = inlined_call_operand.hbm [shape: bf16[32,128], index: 1, kind: input, shape index: {}]
  %s2 = inlined_call_operand.hbm [shape: f32[16,24], index: 2, kind: input, shape index: {}]
  %s3 = inlined_call_operand.hbm [shape: bf16[24,128], index: 3, kind: input, shape index: {}]
  %s4 = inlined_call_operand.vmem [shape: f32[1,128], index: 4, kind: input, shape index: {}]
  %s5 = inlined_call_operand.hbm [shape: f32[16,128], index: 5, kind: output, shape index: {}]
  %s6 = sld [smem:[#allocation0]]
  $region46: #{tpu_custom_call.1} parent=0
    _
  %s8 = ssub.s32 1, %s6
  %s9 = scalar_select 0, %s8, %s6
  $region1: #{tpu_custom_call.1} parent=0
    #allocation2 [shape = 'u8[8192]{0}', space=vmem, size = 0x2000, scoped, tag = 'input window, operand 0, single buffered']
    #allocation3 [shape = 's32[1]{0}', space=sflag, size = 0x4, scoped, tag = 'scoped memory for tpu_custom_call.1']
    #allocation4 [shape = 's32[1]{0}', space=sflag, size = 0x4, scoped, tag = 'scoped memory for tpu_custom_call.1']
    #allocation5 [shape = 'u8[8192]{0}', space=vmem, size = 0x2000, scoped, tag = 'input window, operand 1, single buffered']
    #allocation6 [shape = 's32[1]{0}', space=sflag, size = 0x4, scoped, tag = 'scoped memory for tpu_custom_call.1']
    #allocation7 [shape = 'u8[8192]{0}', space=vmem, size = 0x2000, scoped, tag = 'input window, operand 2, single buffered']
    #allocation8 [shape = 'u8[6144]{0}', space=vmem, size = 0x1800, scoped, tag = 'input window, operand 3, single buffered']
    #allocation9 [shape = 's32[1]{0}', space=sflag, size = 0x4, scoped, tag = 'scoped memory for tpu_custom_call.1']
    #allocation10 [shape = 'u8[8192]{0}', space=vmem, size = 0x2000, scoped, tag = 'output window, operand 0, single buffered']
    %10 = vsyncpa [#allocation3], 0
    %11 = vsyncpa [#allocation6], 0
    %12 = vsyncpa [#allocation9], 0
    %13 = vsyncpa [#allocation4], 0
    // Predicated region
    $region2: #{tpu_custom_call.1} parent=1 // pred_check
      _
    $region3: #{tpu_custom_call.1} parent=1 // pred_check_branch
      %15 = sbr.rel (0) target = $region5
    $region4: #{tpu_custom_call.1} parent=1 // pred_region
      %s17 = ssub.s32 256, 256
      %18 = vsyncadd [#allocation3], %s17
      %s19 = sshll.u32 [#allocation2], 4
      %s20 = int_to_ptr.vmem [resolvable:$true] %s19
      %25 = dma.hbm_to_vmem [thread:$0]  %s0, 256, %s20, [#allocation3], 128, 128, 8
    $region5: #{tpu_custom_call.1} parent=1 // pred_fallthru
      _
    // Predicated region
    $region6: #{tpu_custom_call.1} parent=1 // pred_check
      _
    $region7: #{tpu_custom_call.1} parent=1 // pred_check_branch
      %27 = sbr.rel (0) target = $region9
    $region8: #{tpu_custom_call.1} parent=1 // pred_region
      %s29 = ssub.s32 256, 256
      %30 = vsyncadd [#allocation6], %s29
      %s31 = sshll.u32 [#allocation5], 4
      %s32 = int_to_ptr.vmem [resolvable:$true] %s31
      %37 = dma.hbm_to_vmem [thread:$0]  %s1, 256, %s32, [#allocation6], 64, 64, 4
    $region9: #{tpu_custom_call.1} parent=1 // pred_fallthru
      _
    // Predicated region
    $region10: #{tpu_custom_call.1} parent=1 // pred_check
      _
    $region11: #{tpu_custom_call.1} parent=1 // pred_check_branch
      %39 = sbr.rel (0) target = $region13
    $region12: #{tpu_custom_call.1} parent=1 // pred_region
      %s41 = ssub.s32 256, 256
      %42 = vsyncadd [#allocation6], %s41
      %s43 = sshll.u32 [#allocation7], 4
      %s44 = int_to_ptr.vmem [resolvable:$true] %s43
      %49 = dma.hbm_to_vmem [thread:$0]  %s2, 256, %s44, [#allocation6], 128, 128, 8
    $region13: #{tpu_custom_call.1} parent=1 // pred_fallthru
      _
    // Predicated region
    $region14: #{tpu_custom_call.1} parent=1 // pred_check
      _
    $region15: #{tpu_custom_call.1} parent=1 // pred_check_branch
      %51 = sbr.rel (0) target = $region17
    $region16: #{tpu_custom_call.1} parent=1 // pred_region
      %s53 = ssub.s32 192, 192
      %54 = vsyncadd [#allocation9], %s53
      %s55 = sshll.u32 [#allocation8], 4
      %s56 = int_to_ptr.vmem [resolvable:$true] %s55
      %61 = dma.hbm_to_vmem [thread:$0]  %s3, 192, %s56, [#allocation9], 64, 64, 4
    $region17: #{tpu_custom_call.1} parent=1 // pred_fallthru
      _
    // Predicated region
    $region18: #{tpu_custom_call.1} parent=1 // pred_check
      _
    $region19: #{tpu_custom_call.1} parent=1 // pred_check_branch
      %63 = sbr.rel (0) target = $region21
    $region20: #{tpu_custom_call.1} parent=1 // pred_region
      _
    $region21: #{tpu_custom_call.1} parent=1 // pred_fallthru
      _
    // Predicated region
    $region22: #{tpu_custom_call.1} parent=1 // pred_check
      _
    $region23: #{tpu_custom_call.1} parent=1 // pred_check_branch
      %65 = sbr.rel (0) target = $region25
    $region24: #{tpu_custom_call.1} parent=1 // pred_region
      %66 = dma.done [#allocation3], 256
    $region25: #{tpu_custom_call.1} parent=1 // pred_fallthru
      _
    // Predicated region
    $region26: #{tpu_custom_call.1} parent=1 // pred_check
      _
    $region27: #{tpu_custom_call.1} parent=1 // pred_check_branch
      %68 = sbr.rel (0) target = $region29
    $region28: #{tpu_custom_call.1} parent=1 // pred_region
      %69 = dma.done [#allocation6], 256
    $region29: #{tpu_custom_call.1} parent=1 // pred_fallthru
      _
    // Predicated region
    $region30: #{tpu_custom_call.1} parent=1 // pred_check
      _
    $region31: #{tpu_custom_call.1} parent=1 // pred_check_branch
      %71 = sbr.rel (0) target = $region33
    $region32: #{tpu_custom_call.1} parent=1 // pred_region
      %72 = dma.done [#allocation6], 256
    $region33: #{tpu_custom_call.1} parent=1 // pred_fallthru
      _
    // Predicated region
    $region34: #{tpu_custom_call.1} parent=1 // pred_check
      _
    $region35: #{tpu_custom_call.1} parent=1 // pred_check_branch
      %74 = sbr.rel (0) target = $region37
    $region36: #{tpu_custom_call.1} parent=1 // pred_region
      %75 = dma.done [#allocation9], 192
    $region37: #{tpu_custom_call.1} parent=1 // pred_fallthru
      _
    %v77 = vld [vmem:[#allocation2] sm:$0xff]
    %v78 = vld [vmem:[#allocation2 + $0x8] sm:$0xff]
    %v79 = vpack.c.bf16 %v78, %v77
    %v80 = vld [vmem:[#allocation5] sm:$0xf]
    %v81 = vld [vmem:[#allocation5 + $0x4] sm:$0xf]
    %v82 = vld [vmem:[#allocation5 + $0x8] sm:$0xf]
    %v83 = vld [vmem:[#allocation5 + $0xc] sm:$0xf]
    %v88 = vunpack.c.l.b16 %v80
    %v89 = vunpack.c.l.b16 %v81
    %v90 = vunpack.c.l.b16 %v82
    %v91 = vunpack.c.l.b16 %v83
    %v92 = vpack.c.b16 %v89, %v88
    %v93 = vpack.c.b16 %v91, %v90
    %vm96 = vcmask 261120
    %v98 = vsel %vm96, %v79, 0
    %100 = vmatprep.subr.bf16.mxu0 0
    %101 = vmatpush1.bf16.msra.mxu0 %v92
    %102 = vmatprep.subr.bf16.mxu0 0
    %103 = vmatpush1.bf16.msra.mxu0 %v93
    %104 = vmatprep.subr.bf16.mxu0 0
    %105 = vmatpush1.bf16.msra.mxu0 0
    %106 = vmatprep.subr.bf16.mxu0 0
    %107 = vmatpush1.bf16.msra.mxu0 0
    %108 = vmatprep.subr.bf16.mxu0 0
    %109 = vmatpush1.bf16.msra.mxu0 0
    %110 = vmatprep.subr.bf16.mxu0 0
    %111 = vmatpush1.bf16.msra.mxu0 0
    %112 = vmatprep.subr.bf16.mxu0 0
    %113 = vmatpush1.bf16.msra.mxu0 0
    %114 = vmatprep.subr.bf16.mxu0 0
    %115 = vmatpush1.bf16.msra.mxu0 0
    %116 = vmatprep.subr.bf16.mxu0 0
    %117 = vmatpush1.bf16.msra.mxu0 0
    %118 = vmatprep.subr.bf16.mxu0 0
    %119 = vmatpush1.bf16.msra.mxu0 0
    %120 = vmatprep.subr.bf16.mxu0 0
    %121 = vmatpush1.bf16.msra.mxu0 0
    %122 = vmatprep.subr.bf16.mxu0 0
    %123 = vmatpush1.bf16.msra.mxu0 0
    %124 = vmatprep.subr.bf16.mxu0 0
    %125 = vmatpush1.bf16.msra.mxu0 0
    %126 = vmatprep.subr.bf16.mxu0 0
    %127 = vmatpush1.bf16.msra.mxu0 0
    %128 = vmatprep.subr.bf16.mxu0 0
    %129 = vmatpush1.bf16.msra.mxu0 0
    %130 = vmatprep.subr.bf16.mxu0 0
    %131 = vmatpush1.bf16.msra.mxu0 0
    %132 = vmatprep.mubr.bf16.mxu0 0
    %133 = vmatmul.mubr.bf16.gmra.mrb[0].mxu0 %v98
    %v134 = vpop.f32.mrb[0].mxu0
    %v135 = vadd.f32 0.0, %v134
    %v136 = vpop.f32.mrb[0].mxu0
    %v137 = vpop.f32.mrb[0].mxu0
    %v138 = vadd.f32 0.0, %v137
    %v139 = vpop.f32.mrb[0].mxu0
    %140 = vdwg.mxu0
    %v141 = vld [vmem:[#allocation7] sm:$0xff]
    %v142 = vld [vmem:[#allocation7 + $0x8] sm:$0xff]
    %v143 = vpack.c.bf16 %v142, %v141
    %v144 = vld [vmem:[#allocation8] sm:$0xf]
    %v145 = vld [vmem:[#allocation8 + $0x4] sm:$0xf]
    %v146 = vld [vmem:[#allocation8 + $0x8] sm:$0xf]
    %v147 = vld [vmem:[%s4] sm:$0x1]
    %v149 = vlaneseq
    %v150 = vshrl.u32 %v149, 7
    %v151 = vsub.s32 0, %v150
    %v152 = vrot.slane %v147, %v151
    %v157 = vunpack.c.l.b16 %v144
    %v158 = vunpack.c.l.b16 %v145
    %v159 = vunpack.c.l.b16 %v146
    %v160 = vpack.c.b16 %v158, %v157
    %v161 = vpack.c.b16 %v159, %v159
    %vm163 = vcmask 195584
    %v165 = vsel %vm163, %v143, 0
    %vm167 = vcmask 1043456
    %v169 = vsel %vm167, %v161, 0
    %171 = vmatprep.subr.bf16.mxu0 0
    %172 = vmatpush1.bf16.msra.mxu0 %v160
    %173 = vmatprep.subr.bf16.mxu0 0
    %174 = vmatpush1.bf16.msra.mxu0 %v169
    %175 = vmatprep.subr.bf16.mxu0 0
    %176 = vmatpush1.bf16.msra.mxu0 0
    %177 = vmatprep.subr.bf16.mxu0 0
    %178 = vmatpush1.bf16.msra.mxu0 0
    %179 = vmatprep.subr.bf16.mxu0 0
    %180 = vmatpush1.bf16.msra.mxu0 0
    %181 = vmatprep.subr.bf16.mxu0 0
    %182 = vmatpush1.bf16.msra.mxu0 0
    %183 = vmatprep.subr.bf16.mxu0 0
    %184 = vmatpush1.bf16.msra.mxu0 0
    %185 = vmatprep.subr.bf16.mxu0 0
    %186 = vmatpush1.bf16.msra.mxu0 0
    %187 = vmatprep.subr.bf16.mxu0 0
    %188 = vmatpush1.bf16.msra.mxu0 0
    %189 = vmatprep.subr.bf16.mxu0 0
    %190 = vmatpush1.bf16.msra.mxu0 0
    %191 = vmatprep.subr.bf16.mxu0 0
    %192 = vmatpush1.bf16.msra.mxu0 0
    %193 = vmatprep.subr.bf16.mxu0 0
    %194 = vmatpush1.bf16.msra.mxu0 0
    %195 = vmatprep.subr.bf16.mxu0 0
    %196 = vmatpush1.bf16.msra.mxu0 0
    %197 = vmatprep.subr.bf16.mxu0 0
    %198 = vmatpush1.bf16.msra.mxu0 0
    %199 = vmatprep.subr.bf16.mxu0 0
    %200 = vmatpush1.bf16.msra.mxu0 0
    %201 = vmatprep.subr.bf16.mxu0 0
    %202 = vmatpush1.bf16.msra.mxu0 0
    %203 = vmatprep.mubr.bf16.mxu0 0
    %204 = vmatmul.mubr.bf16.gmra.mrb[0].mxu0 %v165
    %v205 = vpop.f32.mrb[0].mxu0
    %v206 = vadd.f32 %v152, %v205
    %v207 = vpop.f32.mrb[0].mxu0
    %v208 = vpop.f32.mrb[0].mxu0
    %v209 = vadd.f32 %v152, %v208
    %v210 = vpop.f32.mrb[0].mxu0
    %211 = vdwg.mxu0
    %v212 = vxor.u32 %v206, 2147483648
    %v213 = vxor.u32 %v209, 2147483648
    %v214 = vmul.f32 %v212, 1.442695
    %v215 = vpow.pop %v214
    %v216 = vmul.f32 %v213, 1.442695
    %v217 = vpow.pop %v216
    %v218 = vadd.f32 %v215, 1.0
    %v219 = vadd.f32 %v217, 1.0
    %v220 = vrcp.pop %v218
    %v221 = vmul.f32 1.0, %v220
    %v222 = vrcp.pop %v219
    %v223 = vmul.f32 1.0, %v222
    %v224 = vmul.f32 %v221, %v135
    %v225 = vmul.f32 %v223, %v138
    %226 = vst [vmem:[#allocation10] sm:$0xff] %v224
    %227 = vst [vmem:[#allocation10 + $0x8] sm:$0xff] %v225
    // Predicated region
    $region38: #{tpu_custom_call.1} parent=1 // pred_check
      _
    $region39: #{tpu_custom_call.1} parent=1 // pred_check_branch
      %229 = sbr.rel (0) target = $region41
    $region40: #{tpu_custom_call.1} parent=1 // pred_region
      %s231 = ssub.s32 256, 256
      %232 = vsyncadd [#allocation4], %s231
      %s233 = sshll.u32 [#allocation10], 4
      %s234 = int_to_ptr.vmem [resolvable:$true] %s233
      %239 = dma.vmem_to_hbm [thread:$0]  %s234, 256, %s5, [#allocation4], 128, 128, 8
    $region41: #{tpu_custom_call.1} parent=1 // pred_fallthru
      _
    // Predicated region
    $region42: #{tpu_custom_call.1} parent=1 // pred_check
      _
    $region43: #{tpu_custom_call.1} parent=1 // pred_check_branch
      %241 = sbr.rel (0) target = $region45
    $region44: #{tpu_custom_call.1} parent=1 // pred_region
      %242 = dma.done [#allocation4], 256
    $region45: #{tpu_custom_call.1} parent=1 // pred_fallthru
      _
    %243 = vsyncpa [#allocation3], 1
    %244 = vsyncpa [#allocation6], 1
    %245 = vsyncpa [#allocation9], 1
    %246 = vsyncpa [#allocation4], 1

</llo_original>
